<compile_context>
chip_gen: v7x
topology: tpu7x:2x2x1
jax: 0.10.0
libtpu: 0.0.40
codegen_flags: <defaults>
</compile_context>

<pallas_src>
import numpy as np
import jax
import jax.numpy as jnp
from jax.experimental import pallas as pl
from jax.experimental.pallas import tpu as pltpu


# ----------------------------------------------------------------------------
# Synthetic vocab / used_concepts (mirrors the torch module __init__)
# ----------------------------------------------------------------------------
ATTRIBUTES = {
    "color": ["red", "green", "blue", "yellow"],
    "shape": ["cube", "sphere", "cylinder"],
    "size":  ["small", "large"],
}
EXTRA_WORDS = ["<pad>", "left", "right"]        # non-attribute vocab entries

VOCAB_WORDS = EXTRA_WORDS + [w for vs in ATTRIBUTES.values() for w in vs]
WORD2IDX = {w: i for i, w in enumerate(VOCAB_WORDS)}
VOCAB_SIZE = len(VOCAB_WORDS)                   # V
NUM_ATTRS = len(ATTRIBUTES)                     # A
ATTR_NAMES = list(ATTRIBUTES.keys())
ATTR_SIZES = [len(v) for v in ATTRIBUTES.values()]
TOTAL_ATTR_DIM = sum(ATTR_SIZES)                # D == output_dims[1]

D_PAD = 128        # lane-dense object-feature slab width
LANES = 128        # lane width for the relation cast
OBJ_TILE = 1024    # rows per object-feature block   (review: 1024-2048)
REL_TILE = 2048    # rows per relation-cast block    (review: 2048)
REL_COLS = 4       # output_dims[2]


def _round_up(x, m):
    return ((x + m - 1) // m) * m


def _bucket_rows(n, tile):
    """Bucket a row count: powers of two (>=8) below the tile, tile multiples
    above it.  Keeps the number of distinct compiled shapes small while the
    tile always divides the bucket exactly (no edge blocks)."""
    n = max(int(n), 8)
    if n >= tile:
        return _round_up(n, tile)
    return 1 << (n - 1).bit_length()


def build_buffers():
    """Replicates register_buffer('global2local') / ('local2global_<k>')."""
    global2local = np.zeros((VOCAB_SIZE,), dtype=np.int32)
    local2global = {}
    for k, values in ATTRIBUTES.items():
        l2g = np.zeros((len(values),), dtype=np.int32)
        for i, vv in enumerate(values):
            global2local[WORD2IDX[vv]] = i
            l2g[i] = WORD2IDX[vv]
        local2global[k] = l2g
    return global2local, local2global


GLOBAL2LOCAL, LOCAL2GLOBAL = build_buffers()    # host constants, built once


# ----------------------------------------------------------------------------
# Kernel 1: object one-hot features (valmap fused in-kernel, lane-dense out)
# ----------------------------------------------------------------------------
def _obj_onehot_kernel(*refs):
    """refs = (ids_attr0, ..., ids_attrA-1, out).

    ids_attr*: (tile_n, 1) int32 global vocab ids for that attribute.
    out:       (tile_n, D_PAD) float32 — concatenated one-hots in [:, :D].
    """
    out_ref = refs[-1]
    id_refs = refs[:-1]
    lane = jax.lax.broadcasted_iota(jnp.int32, (1, D_PAD), 1)   # column index
    acc = jnp.zeros(out_ref.shape, dtype=jnp.bool_)
    off = 0
    for a, n_a in enumerate(ATTR_SIZES):
        ids = id_refs[a][...]                                   # (tile_n, 1)
        # global2local valmap fused in-kernel: zero-initialized buffer default
        # (local = 0) plus scalar-constant overrides — exact torch semantics.
        local = jnp.zeros_like(ids)
        for v in range(VOCAB_SIZE):
            g = int(GLOBAL2LOCAL[v])
            if g != 0:
                local = jnp.where(ids == v, jnp.int32(g), local)
        # Column key from a lane iota: local index inside this attribute's
        # column range, -1 elsewhere (can never match a local index >= 0).
        colkey = jnp.where((lane >= off) & (lane < off + n_a), lane - off, -1)
        acc = jnp.logical_or(acc, local == colkey)              # bool OR
        off += n_a
    out_ref[...] = acc.astype(jnp.float32)                      # single cast


@jax.jit
def _object_features(*id_arrays):
    """id_arrays: one (total_n,) int array per attribute (global vocab ids).

    Returns a (n_pad, 128) float32 lane-dense slab; rows [:total_n] and
    columns [:TOTAL_ATTR_DIM] are the valid one-hot features.
    """
    total_n = id_arrays[0].shape[0]
    n_pad = _bucket_rows(total_n, OBJ_TILE)
    tile_n = min(OBJ_TILE, n_pad)
    cols = [jnp.pad(a.astype(jnp.int32), (0, n_pad - total_n)).reshape(n_pad, 1)
            for a in id_arrays]
    return pl.pallas_call(
        _obj_onehot_kernel,
        grid=(n_pad // tile_n,),
        in_specs=[pl.BlockSpec((tile_n, 1), lambda i: (i, 0))] * NUM_ATTRS,
        out_specs=pl.BlockSpec((tile_n, D_PAD), lambda i: (i, 0)),
        out_shape=jax.ShapeDtypeStruct((n_pad, D_PAD), jnp.float32),
        compiler_params=pltpu.CompilerParams(
            dimension_semantics=("parallel",)),
    )(*cols)


# ----------------------------------------------------------------------------
# Kernel 2: relation int -> float32 cast, lane-dense row tiles
# ----------------------------------------------------------------------------
def _rel_cast_kernel(rel_ref, out_ref):
    out_ref[...] = rel_ref[...].astype(jnp.float32)


@jax.jit
def _relation_cast(rel):
    """rel: (total_rel, 4) integer spatial relations.
    Returns (rel_pad, 4) float32; rows [:total_rel] are valid."""
    r, c = rel.shape                                  # c == REL_COLS == 4
    rows = pl.cdiv(max(r, 1) * c, LANES)
    rows_pad = _bucket_rows(rows, REL_TILE)
    tile = min(REL_TILE, rows_pad)
    rel_pad = rows_pad * (LANES // c)
    rel2d = jnp.pad(rel.astype(jnp.int32),
                    ((0, rel_pad - r), (0, 0))).reshape(rows_pad, LANES)
    out = pl.pallas_call(
        _rel_cast_kernel,
        grid=(rows_pad // tile,),
        in_specs=[pl.BlockSpec((tile, LANES), lambda i: (i, 0))],
        out_specs=pl.BlockSpec((tile, LANES), lambda i: (i, 0)),
        out_shape=jax.ShapeDtypeStruct((rows_pad, LANES), jnp.float32),
        compiler_params=pltpu.CompilerParams(
            dimension_semantics=("parallel",)),
    )(rel2d)
    return out.reshape(rel_pad, c)                    # contiguous (free) reshape


# ----------------------------------------------------------------------------
# Forward: two batched kernel calls total, then per-scene views (as in torch)
# ----------------------------------------------------------------------------
def scene_graph_groundtruth_forward(input_feat, objects, objects_length, feed_dict):
    del objects  # unused in the torch forward as well
    # TODO(synk): objects_length must be host data (numpy / python ints), which
    # mirrors torch's .item() but without a per-forward device sync; the ragged
    # per-scene output views stay in the Python wrapper (inherent to the API).
    batch = input_feat.shape[0]
    lengths = [int(objects_length[i]) for i in range(batch)]
    total_n = sum(lengths)
    total_rel = sum(n * n for n in lengths)

    # --- batched object features (one jitted kernel path for all scenes) ---
    if total_n > 0:
        id_arrays = []
        for k in ATTR_NAMES:
            a = feed_dict["objects_" + k]
            id_arrays.append(a if a.shape[0] == total_n else a[:total_n])
        obj_slab = _object_features(*id_arrays)          # (n_pad, 128) f32 slab
    else:
        obj_slab = jnp.zeros((0, D_PAD), jnp.float32)

    # --- batched relation cast (one jitted kernel path for all scenes) ---
    if total_rel > 0:
        rel = feed_dict["relations_spatial_relation"]
        rel = rel if rel.shape[0] == total_rel else rel[:total_rel]
        rel_all = _relation_cast(rel)                    # (rel_pad, 4) f32
    else:
        rel_all = jnp.zeros((0, REL_COLS), jnp.float32)

    outputs = []
    oi = ri = 0
    for n in lengths:
        # Column slice [:D] and row trimming are folded into the per-scene
        # ragged views (no extra full-slab copies).
        obj_f = obj_slab[oi:oi + n, :TOTAL_ATTR_DIM]
        rel_f = rel_all[ri:ri + n * n].reshape(n, n, REL_COLS)
        outputs.append((None, obj_f, rel_f))
        oi += n
        ri += n * n
    return outputs


# ----------------------------------------------------------------------------
# Pure-numpy reference (mirrors the torch forward) for correctness checking
# ----------------------------------------------------------------------------
def reference_forward(objects_length, feed_dict_np, global2local):
    outs = []
    oi, ri = 0, 0
    for n in objects_length:
        n = int(n)
        feats = []
        for k, values in ATTRIBUTES.items():
            v = feed_dict_np["objects_" + k][oi:oi + n]
            mapped = global2local[v]
            oh = np.zeros((n, len(values)), dtype=np.float32)
            if n > 0:
                oh[np.arange(n), mapped] = 1.0
            feats.append(oh)
        obj = np.concatenate(feats, axis=-1)
        rel = feed_dict_np["relations_spatial_relation"][ri:ri + n * n].astype(np.float32)
        outs.append((None, obj, rel.reshape(n, n, REL_COLS)))
        oi += n
        ri += n * n
    return outs


if __name__ == "__main__":
    key = jax.random.PRNGKey(0)
    k_in, k_obj, k_rel, *k_attr = jax.random.split(key, 4 + NUM_ATTRS)

    B, C, H, W = 2, 4, 16, 16
    input_feat = jax.random.normal(k_in, (B, C, H, W), dtype=jnp.float32)  # NCHW placeholder
    objects = jax.random.normal(k_obj, (8, 32), dtype=jnp.float32)         # unused, as in torch
    objects_length = np.array([3, 5], dtype=np.int32)                      # HOST lengths
    total_objects = int(objects_length.sum())
    total_relations = int((objects_length.astype(np.int64) ** 2).sum())

    # feed_dict: per-attribute global vocab indices (picked from that attribute's values)
    feed_dict = {}
    for ka, (attr, _values) in zip(k_attr, ATTRIBUTES.items()):
        l2g = jnp.asarray(LOCAL2GLOBAL[attr])
        sel = jax.random.randint(ka, (total_objects,), 0, l2g.shape[0])
        feed_dict["objects_" + attr] = l2g[sel].astype(jnp.int32)
    feed_dict["relations_spatial_relation"] = jax.random.randint(
        k_rel, (total_relations, REL_COLS), 0, 2, dtype=jnp.int32)

    outputs = scene_graph_groundtruth_forward(
        input_feat, objects, objects_length, feed_dict)
    for (_, obj_f, rel_f) in outputs:
        jax.block_until_ready(obj_f)
        jax.block_until_ready(rel_f)

    # correctness check against the numpy reference of the torch semantics
    feed_dict_np = {k: np.asarray(v) for k, v in feed_dict.items()}
    ref = reference_forward(objects_length, feed_dict_np, GLOBAL2LOCAL)
    for (_, o_k, r_k), (_, o_r, r_r) in zip(outputs, ref):
        np.testing.assert_allclose(np.asarray(o_k), o_r, atol=1e-6)
        np.testing.assert_allclose(np.asarray(r_k), r_r, atol=1e-6)
        assert o_k.dtype == jnp.float32 and r_k.dtype == jnp.float32

    print("KERNEL_OK")
</pallas_src>

<mosaic_0001>
module attributes {stable_mosaic.version = 11 : i64} {
  func.func @_obj_onehot_kernel(%arg0: i32, %arg1: memref<8x1xi32, #tpu.memory_space<vmem>>, %arg2: memref<8x1xi32, #tpu.memory_space<vmem>>, %arg3: memref<8x1xi32, #tpu.memory_space<vmem>>, %arg4: memref<8x128xf32, #tpu.memory_space<vmem>>) attributes {dimension_semantics = [#tpu.dimension_semantics<parallel>], iteration_bounds = array<i64: 1>, scalar_prefetch = 0 : i64, scratch_operands = 0 : i64, tpu.core_type = #tpu.core_type<tc>, window_params = [{transform_indices = @transform_0, window_bounds = array<i64: 8, 1>}, {transform_indices = @transform_1, window_bounds = array<i64: 8, 1>}, {transform_indices = @transform_2, window_bounds = array<i64: 8, 1>}, {transform_indices = @transform_3, window_bounds = array<i64: 8, 128>}]} {
    %0 = tpu.iota {dimensions = array<i32: 1>} : vector<1x128xi32>
    %false = arith.constant false
    %1 = vector.broadcast %false : i1 to vector<8x128xi1>
    %c0 = arith.constant 0 : index
    %c0_0 = arith.constant 0 : index
    %2 = vector.load %arg1[%c0, %c0_0] : memref<8x1xi32, #tpu.memory_space<vmem>>, vector<8x1xi32>
    %c0_i32 = arith.constant 0 : i32
    %3 = vector.broadcast %c0_i32 : i32 to vector<8x1xi32>
    %c4_i32 = arith.constant 4 : i32
    %4 = vector.broadcast %c4_i32 : i32 to vector<8x1xi32>
    %5 = arith.cmpi eq, %2, %4 : vector<8x1xi32>
    %c1_i32 = arith.constant 1 : i32
    %6 = vector.broadcast %c1_i32 : i32 to vector<8x1xi32>
    %7 = arith.select %5, %6, %3 : vector<8x1xi1>, vector<8x1xi32>
    %c5_i32 = arith.constant 5 : i32
    %8 = vector.broadcast %c5_i32 : i32 to vector<8x1xi32>
    %9 = arith.cmpi eq, %2, %8 : vector<8x1xi32>
    %c2_i32 = arith.constant 2 : i32
    %10 = vector.broadcast %c2_i32 : i32 to vector<8x1xi32>
    %11 = arith.select %9, %10, %7 : vector<8x1xi1>, vector<8x1xi32>
    %c6_i32 = arith.constant 6 : i32
    %12 = vector.broadcast %c6_i32 : i32 to vector<8x1xi32>
    %13 = arith.cmpi eq, %2, %12 : vector<8x1xi32>
    %c3_i32 = arith.constant 3 : i32
    %14 = vector.broadcast %c3_i32 : i32 to vector<8x1xi32>
    %15 = arith.select %13, %14, %11 : vector<8x1xi1>, vector<8x1xi32>
    %c8_i32 = arith.constant 8 : i32
    %16 = vector.broadcast %c8_i32 : i32 to vector<8x1xi32>
    %17 = arith.cmpi eq, %2, %16 : vector<8x1xi32>
    %c1_i32_1 = arith.constant 1 : i32
    %18 = vector.broadcast %c1_i32_1 : i32 to vector<8x1xi32>
    %19 = arith.select %17, %18, %15 : vector<8x1xi1>, vector<8x1xi32>
    %c9_i32 = arith.constant 9 : i32
    %20 = vector.broadcast %c9_i32 : i32 to vector<8x1xi32>
    %21 = arith.cmpi eq, %2, %20 : vector<8x1xi32>
    %c2_i32_2 = arith.constant 2 : i32
    %22 = vector.broadcast %c2_i32_2 : i32 to vector<8x1xi32>
    %23 = arith.select %21, %22, %19 : vector<8x1xi1>, vector<8x1xi32>
    %c11_i32 = arith.constant 11 : i32
    %24 = vector.broadcast %c11_i32 : i32 to vector<8x1xi32>
    %25 = arith.cmpi eq, %2, %24 : vector<8x1xi32>
    %c1_i32_3 = arith.constant 1 : i32
    %26 = vector.broadcast %c1_i32_3 : i32 to vector<8x1xi32>
    %27 = arith.select %25, %26, %23 : vector<8x1xi1>, vector<8x1xi32>
    %c0_i32_4 = arith.constant 0 : i32
    %28 = vector.broadcast %c0_i32_4 : i32 to vector<1x128xi32>
    %29 = arith.cmpi sge, %0, %28 : vector<1x128xi32>
    %c4_i32_5 = arith.constant 4 : i32
    %30 = vector.broadcast %c4_i32_5 : i32 to vector<1x128xi32>
    %31 = arith.cmpi slt, %0, %30 : vector<1x128xi32>
    %32 = arith.andi %29, %31 : vector<1x128xi1>
    %c0_i32_6 = arith.constant 0 : i32
    %33 = vector.broadcast %c0_i32_6 : i32 to vector<1x128xi32>
    %34 = arith.subi %0, %33 : vector<1x128xi32>
    %c-1_i32 = arith.constant -1 : i32
    %35 = vector.broadcast %c-1_i32 : i32 to vector<1x128xi32>
    %36 = arith.select %32, %34, %35 : vector<1x128xi1>, vector<1x128xi32>
    %37 = vector.broadcast %27 : vector<8x1xi32> to vector<8x128xi32>
    %38 = vector.broadcast %36 : vector<1x128xi32> to vector<8x128xi32>
    %39 = arith.cmpi eq, %37, %38 : vector<8x128xi32>
    %40 = arith.ori %1, %39 : vector<8x128xi1>
    %c0_7 = arith.constant 0 : index
    %c0_8 = arith.constant 0 : index
    %41 = vector.load %arg2[%c0_7, %c0_8] : memref<8x1xi32, #tpu.memory_space<vmem>>, vector<8x1xi32>
    %c0_i32_9 = arith.constant 0 : i32
    %42 = vector.broadcast %c0_i32_9 : i32 to vector<8x1xi32>
    %c4_i32_10 = arith.constant 4 : i32
    %43 = vector.broadcast %c4_i32_10 : i32 to vector<8x1xi32>
    %44 = arith.cmpi eq, %41, %43 : vector<8x1xi32>
    %c1_i32_11 = arith.constant 1 : i32
    %45 = vector.broadcast %c1_i32_11 : i32 to vector<8x1xi32>
    %46 = arith.select %44, %45, %42 : vector<8x1xi1>, vector<8x1xi32>
    %c5_i32_12 = arith.constant 5 : i32
    %47 = vector.broadcast %c5_i32_12 : i32 to vector<8x1xi32>
    %48 = arith.cmpi eq, %41, %47 : vector<8x1xi32>
    %c2_i32_13 = arith.constant 2 : i32
    %49 = vector.broadcast %c2_i32_13 : i32 to vector<8x1xi32>
    %50 = arith.select %48, %49, %46 : vector<8x1xi1>, vector<8x1xi32>
    %c6_i32_14 = arith.constant 6 : i32
    %51 = vector.broadcast %c6_i32_14 : i32 to vector<8x1xi32>
    %52 = arith.cmpi eq, %41, %51 : vector<8x1xi32>
    %c3_i32_15 = arith.constant 3 : i32
    %53 = vector.broadcast %c3_i32_15 : i32 to vector<8x1xi32>
    %54 = arith.select %52, %53, %50 : vector<8x1xi1>, vector<8x1xi32>
    %c8_i32_16 = arith.constant 8 : i32
    %55 = vector.broadcast %c8_i32_16 : i32 to vector<8x1xi32>
    %56 = arith.cmpi eq, %41, %55 : vector<8x1xi32>
    %c1_i32_17 = arith.constant 1 : i32
    %57 = vector.broadcast %c1_i32_17 : i32 to vector<8x1xi32>
    %58 = arith.select %56, %57, %54 : vector<8x1xi1>, vector<8x1xi32>
    %c9_i32_18 = arith.constant 9 : i32
    %59 = vector.broadcast %c9_i32_18 : i32 to vector<8x1xi32>
    %60 = arith.cmpi eq, %41, %59 : vector<8x1xi32>
    %c2_i32_19 = arith.constant 2 : i32
    %61 = vector.broadcast %c2_i32_19 : i32 to vector<8x1xi32>
    %62 = arith.select %60, %61, %58 : vector<8x1xi1>, vector<8x1xi32>
    %c11_i32_20 = arith.constant 11 : i32
    %63 = vector.broadcast %c11_i32_20 : i32 to vector<8x1xi32>
    %64 = arith.cmpi eq, %41, %63 : vector<8x1xi32>
    %c1_i32_21 = arith.constant 1 : i32
    %65 = vector.broadcast %c1_i32_21 : i32 to vector<8x1xi32>
    %66 = arith.select %64, %65, %62 : vector<8x1xi1>, vector<8x1xi32>
    %c4_i32_22 = arith.constant 4 : i32
    %67 = vector.broadcast %c4_i32_22 : i32 to vector<1x128xi32>
    %68 = arith.cmpi sge, %0, %67 : vector<1x128xi32>
    %c7_i32 = arith.constant 7 : i32
    %69 = vector.broadcast %c7_i32 : i32 to vector<1x128xi32>
    %70 = arith.cmpi slt, %0, %69 : vector<1x128xi32>
    %71 = arith.andi %68, %70 : vector<1x128xi1>
    %c4_i32_23 = arith.constant 4 : i32
    %72 = vector.broadcast %c4_i32_23 : i32 to vector<1x128xi32>
    %73 = arith.subi %0, %72 : vector<1x128xi32>
    %c-1_i32_24 = arith.constant -1 : i32
    %74 = vector.broadcast %c-1_i32_24 : i32 to vector<1x128xi32>
    %75 = arith.select %71, %73, %74 : vector<1x128xi1>, vector<1x128xi32>
    %76 = vector.broadcast %66 : vector<8x1xi32> to vector<8x128xi32>
    %77 = vector.broadcast %75 : vector<1x128xi32> to vector<8x128xi32>
    %78 = arith.cmpi eq, %76, %77 : vector<8x128xi32>
    %79 = arith.ori %40, %78 : vector<8x128xi1>
    %c0_25 = arith.constant 0 : index
    %c0_26 = arith.constant 0 : index
    %80 = vector.load %arg3[%c0_25, %c0_26] : memref<8x1xi32, #tpu.memory_space<vmem>>, vector<8x1xi32>
    %c0_i32_27 = arith.constant 0 : i32
    %81 = vector.broadcast %c0_i32_27 : i32 to vector<8x1xi32>
    %c4_i32_28 = arith.constant 4 : i32
    %82 = vector.broadcast %c4_i32_28 : i32 to vector<8x1xi32>
    %83 = arith.cmpi eq, %80, %82 : vector<8x1xi32>
    %c1_i32_29 = arith.constant 1 : i32
    %84 = vector.broadcast %c1_i32_29 : i32 to vector<8x1xi32>
    %85 = arith.select %83, %84, %81 : vector<8x1xi1>, vector<8x1xi32>
    %c5_i32_30 = arith.constant 5 : i32
    %86 = vector.broadcast %c5_i32_30 : i32 to vector<8x1xi32>
    %87 = arith.cmpi eq, %80, %86 : vector<8x1xi32>
    %c2_i32_31 = arith.constant 2 : i32
    %88 = vector.broadcast %c2_i32_31 : i32 to vector<8x1xi32>
    %89 = arith.select %87, %88, %85 : vector<8x1xi1>, vector<8x1xi32>
    %c6_i32_32 = arith.constant 6 : i32
    %90 = vector.broadcast %c6_i32_32 : i32 to vector<8x1xi32>
    %91 = arith.cmpi eq, %80, %90 : vector<8x1xi32>
    %c3_i32_33 = arith.constant 3 : i32
    %92 = vector.broadcast %c3_i32_33 : i32 to vector<8x1xi32>
    %93 = arith.select %91, %92, %89 : vector<8x1xi1>, vector<8x1xi32>
    %c8_i32_34 = arith.constant 8 : i32
    %94 = vector.broadcast %c8_i32_34 : i32 to vector<8x1xi32>
    %95 = arith.cmpi eq, %80, %94 : vector<8x1xi32>
    %c1_i32_35 = arith.constant 1 : i32
    %96 = vector.broadcast %c1_i32_35 : i32 to vector<8x1xi32>
    %97 = arith.select %95, %96, %93 : vector<8x1xi1>, vector<8x1xi32>
    %c9_i32_36 = arith.constant 9 : i32
    %98 = vector.broadcast %c9_i32_36 : i32 to vector<8x1xi32>
    %99 = arith.cmpi eq, %80, %98 : vector<8x1xi32>
    %c2_i32_37 = arith.constant 2 : i32
    %100 = vector.broadcast %c2_i32_37 : i32 to vector<8x1xi32>
    %101 = arith.select %99, %100, %97 : vector<8x1xi1>, vector<8x1xi32>
    %c11_i32_38 = arith.constant 11 : i32
    %102 = vector.broadcast %c11_i32_38 : i32 to vector<8x1xi32>
    %103 = arith.cmpi eq, %80, %102 : vector<8x1xi32>
    %c1_i32_39 = arith.constant 1 : i32
    %104 = vector.broadcast %c1_i32_39 : i32 to vector<8x1xi32>
    %105 = arith.select %103, %104, %101 : vector<8x1xi1>, vector<8x1xi32>
    %c7_i32_40 = arith.constant 7 : i32
    %106 = vector.broadcast %c7_i32_40 : i32 to vector<1x128xi32>
    %107 = arith.cmpi sge, %0, %106 : vector<1x128xi32>
    %c9_i32_41 = arith.constant 9 : i32
    %108 = vector.broadcast %c9_i32_41 : i32 to vector<1x128xi32>
    %109 = arith.cmpi slt, %0, %108 : vector<1x128xi32>
    %110 = arith.andi %107, %109 : vector<1x128xi1>
    %c7_i32_42 = arith.constant 7 : i32
    %111 = vector.broadcast %c7_i32_42 : i32 to vector<1x128xi32>
    %112 = arith.subi %0, %111 : vector<1x128xi32>
    %c-1_i32_43 = arith.constant -1 : i32
    %113 = vector.broadcast %c-1_i32_43 : i32 to vector<1x128xi32>
    %114 = arith.select %110, %112, %113 : vector<1x128xi1>, vector<1x128xi32>
    %115 = vector.broadcast %105 : vector<8x1xi32> to vector<8x128xi32>
    %116 = vector.broadcast %114 : vector<1x128xi32> to vector<8x128xi32>
    %117 = arith.cmpi eq, %115, %116 : vector<8x128xi32>
    %118 = arith.ori %79, %117 : vector<8x128xi1>
    %119 = arith.extui %118 : vector<8x128xi1> to vector<8x128xi32>
    %120 = arith.sitofp %119 : vector<8x128xi32> to vector<8x128xf32>
    %c0_44 = arith.constant 0 : index
    %c0_45 = arith.constant 0 : index
    %121 = vector.load %arg4[%c0_44, %c0_45] : memref<8x128xf32, #tpu.memory_space<vmem>>, vector<8x128xf32>
    tpu.vector_store %arg4[%c0_44, %c0_45], %120 {strides = array<i32>} : memref<8x128xf32, #tpu.memory_space<vmem>>, vector<8x128xf32>,
    return
  }
  func.func @transform_0(%arg0: i32) -> (i32, i32) {
    %c0_i32 = arith.constant 0 : i32
    %c0_i32_0 = arith.constant 0 : i32
    return %arg0, %c0_i32 : i32, i32
  }
  func.func @transform_1(%arg0: i32) -> (i32, i32) {
    %c0_i32 = arith.constant 0 : i32
    %c0_i32_0 = arith.constant 0 : i32
    return %arg0, %c0_i32 : i32, i32
  }
  func.func @transform_2(%arg0: i32) -> (i32, i32) {
    %c0_i32 = arith.constant 0 : i32
    %c0_i32_0 = arith.constant 0 : i32
    return %arg0, %c0_i32 : i32, i32
  }
  func.func @transform_3(%arg0: i32) -> (i32, i32) {
    %c0_i32 = arith.constant 0 : i32
    %c0_i32_0 = arith.constant 0 : i32
    return %arg0, %c0_i32 : i32, i32
  }
}

</mosaic_0001>

<llo_original>
// kernel: _object_features.1
$region0: #{_object_features.1}
  #allocation0 [shape = 'u32[]', space=smem, size = 0x4, offset = 0x4, fixed_abs, tag = 'smem constant byte address 0x4 - core index']
  #allocation1 [shape = 'u32[144,128]{1,0:T(1,128)}', space=vmem, size = 0x12000, scoped, tag = 'internal scratch']
  %s0 = inlined_call_operand.vmem [shape: s32[8,1], index: 0, kind: input, shape index: {}]
  %s1 = inlined_call_operand.vmem [shape: s32[8,1], index: 1, kind: input, shape index: {}]
  %s2 = inlined_call_operand.vmem [shape: s32[8,1], index: 2, kind: input, shape index: {}]
  %s3 = inlined_call_operand.hbm [shape: f32[8,128], index: 3, kind: output, shape index: {}]
  %s4 = sld [smem:[#allocation0]]
  $region22: #{_object_features.1} parent=0
    _
  %s6 = ssub.s32 1, %s4
  %s7 = scalar_select 0, %s6, %s4
  $region1: #{_object_features.1} parent=0
    #allocation2 [shape = 'u8[4096]{0}', space=vmem, size = 0x1000, scoped, tag = 'output window, operand 0, single buffered']
    #allocation3 [shape = 's32[1]{0}', space=sflag, size = 0x4, scoped, tag = 'scoped memory for _object_features.1']
    %8 = vsyncpa [#allocation3], 0
    // Predicated region
    $region2: #{_object_features.1} parent=1 // pred_check
      _
    $region3: #{_object_features.1} parent=1 // pred_check_branch
      %10 = sbr.rel (0) target = $region5
    $region4: #{_object_features.1} parent=1 // pred_region
      _
    $region5: #{_object_features.1} parent=1 // pred_fallthru
      _
    // Predicated region
    $region6: #{_object_features.1} parent=1 // pred_check
      _
    $region7: #{_object_features.1} parent=1 // pred_check_branch
      %12 = sbr.rel (0) target = $region9
    $region8: #{_object_features.1} parent=1 // pred_region
      _
    $region9: #{_object_features.1} parent=1 // pred_fallthru
      _
    // Predicated region
    $region10: #{_object_features.1} parent=1 // pred_check
      _
    $region11: #{_object_features.1} parent=1 // pred_check_branch
      %14 = sbr.rel (0) target = $region13
    $region12: #{_object_features.1} parent=1 // pred_region
      _
    $region13: #{_object_features.1} parent=1 // pred_fallthru
      _
    %v15 = vlaneseq
    %v16 = vand.u32 %v15, 127
    %v17 = vld [vmem:[%s0] sm:$0xff]
    %vm18 = vcmp.eq.s32.totalorder %v17, 4
    %v19 = vsel %vm18, 1, 0
    %vm20 = vcmp.eq.s32.totalorder %v17, 5
    %v21 = vsel %vm20, 2, %v19
    %vm22 = vcmp.eq.s32.totalorder %v17, 6
    %v23 = vsel %vm22, 3, %v21
    %vm24 = vcmp.eq.s32.totalorder %v17, 8
    %v25 = vsel %vm24, 1, %v23
    %vm26 = vcmp.eq.s32.totalorder %v17, 9
    %v27 = vsel %vm26, 2, %v25
    %vm28 = vcmp.eq.s32.totalorder %v17, 11
    %v29 = vsel %vm28, 1, %v27
    %vm30 = vcmp.ge.s32.totalorder %v16, 0
    %vm31 = vcmp.lt.s32.totalorder %v16, 4
    %vm32 = vmand %vm30, %vm31
    %v33 = vsel %vm32, %v16, 4294967295
    %34 = vset.pattern.permute.xlu0 0
    %35 = vperm.xlu0 %34, %v29
    %v36 = vpop.permute.xlu0 %35
    %vm37 = vcmp.eq.s32.totalorder %v36, %v33
    %v38 = vld [vmem:[%s1] sm:$0xff]
    %vm39 = vcmp.eq.s32.totalorder %v38, 4
    %v40 = vsel %vm39, 1, 0
    %vm41 = vcmp.eq.s32.totalorder %v38, 5
    %v42 = vsel %vm41, 2, %v40
    %vm43 = vcmp.eq.s32.totalorder %v38, 6
    %v44 = vsel %vm43, 3, %v42
    %vm45 = vcmp.eq.s32.totalorder %v38, 8
    %v46 = vsel %vm45, 1, %v44
    %vm47 = vcmp.eq.s32.totalorder %v38, 9
    %v48 = vsel %vm47, 2, %v46
    %vm49 = vcmp.eq.s32.totalorder %v38, 11
    %v50 = vsel %vm49, 1, %v48
    %vm51 = vcmp.ge.s32.totalorder %v16, 4
    %vm52 = vcmp.lt.s32.totalorder %v16, 7
    %vm53 = vmand %vm51, %vm52
    %v54 = vsub.s32 %v16, 4
    %v55 = vsel %vm53, %v54, 4294967295
    %56 = vset.pattern.permute.xlu0 0
    %57 = vperm.xlu0 %56, %v50
    %v58 = vpop.permute.xlu0 %57
    %vm59 = vcmp.eq.s32.totalorder %v58, %v55
    %vm60 = vmor %vm37, %vm59
    %v61 = vld [vmem:[%s2] sm:$0xff]
    %vm62 = vcmp.eq.s32.totalorder %v61, 4
    %v63 = vsel %vm62, 1, 0
    %vm64 = vcmp.eq.s32.totalorder %v61, 5
    %v65 = vsel %vm64, 2, %v63
    %vm66 = vcmp.eq.s32.totalorder %v61, 6
    %v67 = vsel %vm66, 3, %v65
    %vm68 = vcmp.eq.s32.totalorder %v61, 8
    %v69 = vsel %vm68, 1, %v67
    %vm70 = vcmp.eq.s32.totalorder %v61, 9
    %v71 = vsel %vm70, 2, %v69
    %vm72 = vcmp.eq.s32.totalorder %v61, 11
    %v73 = vsel %vm72, 1, %v71
    %vm74 = vcmp.ge.s32.totalorder %v16, 7
    %vm75 = vcmp.lt.s32.totalorder %v16, 9
    %vm76 = vmand %vm74, %vm75
    %v77 = vsub.s32 %v16, 7
    %v78 = vsel %vm76, %v77, 4294967295
    %79 = vset.pattern.permute.xlu0 0
    %80 = vperm.xlu0 %79, %v73
    %v81 = vpop.permute.xlu0 %80
    %vm82 = vcmp.eq.s32.totalorder %v81, %v78
    %vm83 = vmor %vm60, %vm82
    %v84 = vsel %vm83, 1, 0
    %v85 = vcvt.s32.f32 %v84
    %86 = vst [vmem:[#allocation2] sm:$0xff] %v85
    // Predicated region
    $region14: #{_object_features.1} parent=1 // pred_check
      _
    $region15: #{_object_features.1} parent=1 // pred_check_branch
      %88 = sbr.rel (0) target = $region17
    $region16: #{_object_features.1} parent=1 // pred_region
      %s90 = ssub.s32 128, 128
      %91 = vsyncadd [#allocation3], %s90
      %s93 = sshll.u32 [#allocation2], 4
      %s94 = int_to_ptr.vmem [resolvable:$true] %s93
      %96 = dma.vmem_to_hbm [thread:$0]  %s94, 128, %s3, [#allocation3]
    $region17: #{_object_features.1} parent=1 // pred_fallthru
      _
    // Predicated region
    $region18: #{_object_features.1} parent=1 // pred_check
      _
    $region19: #{_object_features.1} parent=1 // pred_check_branch
      %98 = sbr.rel (0) target = $region21
    $region20: #{_object_features.1} parent=1 // pred_region
      %99 = dma.done [#allocation3], 128
    $region21: #{_object_features.1} parent=1 // pred_fallthru
      _
    %100 = vsyncpa [#allocation3], 1

</llo_original>
